<compile_context>
chip_gen: v7x
topology: tpu7x:2x2x1
jax: 0.10.0
libtpu: 0.0.40
codegen_flags: <defaults>
</compile_context>

<pallas_src>
import functools
import math

import jax
import jax.numpy as jnp
from jax.experimental import pallas as pl
from jax.experimental.pallas import tpu as pltpu

_LANE = 128


def _round_up(n, m):
    return ((n + m - 1) // m) * m


def _lcm(a, b):
    return a * b // math.gcd(a, b)


def _pad_to(x, shape):
    pads = [(0, t - s) for s, t in zip(x.shape, shape)]
    if any(p[1] for p in pads):
        return jnp.pad(x, pads)
    return x


def _pad2d(w, rows, cols):
    return jnp.pad(w, ((0, rows - w.shape[0]), (0, cols - w.shape[1])))


def _pad1d(b, n):
    return jnp.pad(b, (0, n - b.shape[0]))


def _vmem_capacity_bytes():
    """Physical VMEM per TensorCore (128 MiB v5e/v6e, 64 MiB v7x)."""
    try:
        return int(pltpu.get_tpu_info().vmem_capacity_bytes)
    except Exception:
        return 64 * 1024 * 1024  # v7x-safe lower bound


def _pick_batch_tile(B, s_enc, s_dec, sub, per_elem_bytes, fixed_bytes, budget_bytes):
    """Largest Bt that (a) fits the VMEM budget, (b) leaves >=2 grid steps when
    B >= 2 (v7x megacore), (c) keeps 2-D flattened blocks sublane-aligned."""
    # Alignment: Bt*S_enc and Bt*S_dec must be multiples of `sub`.
    m = _lcm(sub // math.gcd(sub, s_enc), sub // math.gcd(sub, s_dec))
    bt_vmem = max(1, (budget_bytes - fixed_bytes) // max(1, per_elem_bytes))
    bt_mega = -(-B // 2) if B >= 2 else 1  # ceil(B/2) -> grid of >= 2 steps
    bt = max(1, min(int(bt_vmem), bt_mega, B))
    bt = max(m, (bt // m) * m)  # round down to alignment multiple, floor at m
    return bt


def _seq2seq_kernel(enc_x_ref, dec_x_ref,
                    we_ref, be_ref,
                    wd_ref, wl_ref, bd_ref,
                    wo_ref, bo_ref,
                    out_ref, *, bt, s_enc, s_dec, inv_s_enc):
    """One batch tile per grid step; all tensors stay 2-D (rows = b*S + s)."""
    hp = we_ref.shape[1]

    # ----- encoder ---------------------------------------------------------
    h_enc = jnp.tanh(
        jnp.dot(enc_x_ref[...], we_ref[...], preferred_element_type=jnp.float32)
        + be_ref[...]
    )                                                      # (Bt*S_enc, Hp) f32
    # Per-batch mean over the encoder sequence, normalized in f32 before any
    # narrower cast (precision fix from review).
    latent = jnp.sum(h_enc.reshape(bt, s_enc, hp), axis=1) * inv_s_enc  # (Bt, Hp)

    # ----- decoder (2-D end-to-end) ----------------------------------------
    dec_pre = jnp.dot(dec_x_ref[...], wd_ref[...],
                      preferred_element_type=jnp.float32)   # (Bt*S_dec, Hp)
    lat_proj = jnp.dot(latent.astype(wl_ref.dtype), wl_ref[...],
                       preferred_element_type=jnp.float32)  # (Bt, Hp)
    # Row-wise broadcast of the latent projection to match dec_pre's
    # (b*S_dec + s) row layout; avoids reshaping the large intermediates.
    lat_rows = jnp.broadcast_to(
        lat_proj[:, None, :], (bt, s_dec, hp)).reshape(bt * s_dec, hp)
    h_dec = jnp.tanh(dec_pre + lat_rows + bd_ref[...])      # (Bt*S_dec, Hp) f32
    y = (jnp.dot(h_dec.astype(wo_ref.dtype), wo_ref[...],
                 preferred_element_type=jnp.float32)
         + bo_ref[...])                                      # (Bt*S_dec, Dp_out)
    out_ref[...] = y.astype(out_ref.dtype)


def seq2seq_forward(enc_x, dec_x, params, *, compute_dtype=jnp.float32):
    """Pad feature dims to 128 lanes, flatten (B,S,D)->(B*S,D), tile over batch."""
    B, S_enc, D_in = enc_x.shape
    B2, S_dec, D_dec = dec_x.shape
    assert B == B2
    We, be, Wd, Wl, bd, Wo, bo = (
        params["We"], params["be"], params["Wd"], params["Wl"],
        params["bd"], params["Wo"], params["bo"],
    )
    H = We.shape[0]
    D_out = Wo.shape[0]
    out_dtype = enc_x.dtype

    Dp_in, Dp_dec, Hp, Dp_out = (_round_up(D_in, _LANE), _round_up(D_dec, _LANE),
                                 _round_up(H, _LANE), _round_up(D_out, _LANE))

    csize = jnp.dtype(compute_dtype).itemsize
    osize = jnp.dtype(out_dtype).itemsize
    sub = 8 if csize >= 4 else 16  # sublane alignment for the flattened blocks

    # ---- VMEM budgeting --------------------------------------------------
    # Per-batch-element: double-buffered activation/output tiles + f32
    # intermediates (h_enc, dec_pre, lat_rows, h_dec).  Fixed: weights/biases
    # single-buffered (pl.Buffered(1)).
    per_elem = (2 * (S_enc * Dp_in * csize + S_dec * Dp_dec * csize
                     + S_dec * Dp_out * osize)
                + 4 * (S_enc * Hp + 3 * S_dec * Hp + Hp))
    fixed = (csize * (Dp_in * Hp + Dp_dec * Hp + Hp * Hp + Hp * Dp_out)
             + 4 * (2 * Hp + Dp_out))
    cap = _vmem_capacity_bytes()
    vmem_limit = int(cap * 7 // 8)          # headroom below physical VMEM
    budget = int(vmem_limit * 4 // 5)       # working-set target for tile sizing

    Bt = _pick_batch_tile(B, S_enc, S_dec, sub, per_elem, fixed, budget)
    Bp = _round_up(B, Bt)                   # zero-pad awkward batch sizes
    grid = (Bp // Bt,)

    # ---- weight / activation prep (glue, runs in XLA) ---------------------
    # PyTorch (out,in) -> (in,out), zero-pad to lane-dense tiles.  Zero padding
    # is exact: tanh(0)=0 and padded weight rows/cols contribute nothing.
    We_t = _pad2d(We.T, Dp_in, Hp).astype(compute_dtype)
    Wd_t = _pad2d(Wd.T, Dp_dec, Hp).astype(compute_dtype)
    Wl_t = _pad2d(Wl.T, Hp, Hp).astype(compute_dtype)       # unscaled (see kernel)
    Wo_t = _pad2d(Wo.T, Hp, Dp_out).astype(compute_dtype)
    be_r = _pad1d(be, Hp).reshape(1, Hp).astype(jnp.float32)
    bd_r = _pad1d(bd, Hp).reshape(1, Hp).astype(jnp.float32)
    bo_r = _pad1d(bo, Dp_out).reshape(1, Dp_out).astype(jnp.float32)

    enc_flat = _pad_to(enc_x, (Bp, S_enc, Dp_in)).astype(compute_dtype)
    enc_flat = enc_flat.reshape(Bp * S_enc, Dp_in)
    dec_flat = _pad_to(dec_x, (Bp, S_dec, Dp_dec)).astype(compute_dtype)
    dec_flat = dec_flat.reshape(Bp * S_dec, Dp_dec)

    # Resident blocks: constant index map + single buffer (no pointless
    # double-buffering of weights).
    def resident(shape):
        n = len(shape)
        return pl.BlockSpec(shape, lambda b, _n=n: (0,) * _n,
                            pipeline_mode=pl.Buffered(1))

    kernel = functools.partial(_seq2seq_kernel, bt=Bt, s_enc=S_enc, s_dec=S_dec,
                               inv_s_enc=1.0 / float(S_enc))

    grid_spec = pltpu.PrefetchScalarGridSpec(
        num_scalar_prefetch=0,
        grid=grid,
        in_specs=[
            pl.BlockSpec((Bt * S_enc, Dp_in), lambda b: (b, 0)),
            pl.BlockSpec((Bt * S_dec, Dp_dec), lambda b: (b, 0)),
            resident(We_t.shape),
            resident(be_r.shape),
            resident(Wd_t.shape),
            resident(Wl_t.shape),
            resident(bd_r.shape),
            resident(Wo_t.shape),
            resident(bo_r.shape),
        ],
        out_specs=pl.BlockSpec((Bt * S_dec, Dp_out), lambda b: (b, 0)),
    )

    out_padded = pl.pallas_call(
        kernel,
        out_shape=jax.ShapeDtypeStruct((Bp * S_dec, Dp_out), out_dtype),
        grid_spec=grid_spec,
        compiler_params=pltpu.CompilerParams(
            dimension_semantics=("parallel",),
            vmem_limit_bytes=vmem_limit),
    )(enc_flat, dec_flat, We_t, be_r, Wd_t, Wl_t, bd_r, Wo_t, bo_r)

    out = out_padded.reshape(Bp, S_dec, Dp_out)
    return out[:B, :, :D_out]


def seq2seq_reference(enc_x, dec_x, params):
    """Pure-JAX reference mirroring the PyTorch module semantics."""
    h_enc = jnp.tanh(jnp.einsum("bsd,hd->bsh", enc_x, params["We"]) + params["be"])
    latent = jnp.mean(h_enc, axis=1)                       # (B, H)
    h_dec = jnp.tanh(
        jnp.einsum("bsd,hd->bsh", dec_x, params["Wd"])
        + jnp.einsum("bh,kh->bk", latent, params["Wl"])[:, None, :]
        + params["bd"]
    )
    return jnp.einsum("bsh,oh->bso", h_dec, params["Wo"]) + params["bo"]


def init_params(key, d_in, d_dec, hidden, d_out):
    ks = jax.random.split(key, 7)
    scale = 0.1
    return {
        "We": scale * jax.random.normal(ks[0], (hidden, d_in), jnp.float32),
        "be": scale * jax.random.normal(ks[1], (hidden,), jnp.float32),
        "Wd": scale * jax.random.normal(ks[2], (hidden, d_dec), jnp.float32),
        "Wl": scale * jax.random.normal(ks[3], (hidden, hidden), jnp.float32),
        "bd": scale * jax.random.normal(ks[4], (hidden,), jnp.float32),
        "Wo": scale * jax.random.normal(ks[5], (d_out, hidden), jnp.float32),
        "bo": scale * jax.random.normal(ks[6], (d_out,), jnp.float32),
    }


if __name__ == "__main__":
    B, S_ENC, S_DEC = 2, 8, 8
    D_IN, D_DEC, HIDDEN, D_OUT = 32, 32, 32, 32

    key = jax.random.PRNGKey(0)
    k_enc, k_dec, k_par = jax.random.split(key, 3)

    enc_x = jax.random.normal(k_enc, (B, S_ENC, D_IN), jnp.float32)
    dec_x = jax.random.normal(k_dec, (B, S_DEC, D_DEC), jnp.float32)
    params = init_params(k_par, D_IN, D_DEC, HIDDEN, D_OUT)

    ref = seq2seq_reference(enc_x, dec_x, params)

    # f32 path (exact vs reference); grid has 2 steps so the "parallel" batch
    # axis can shard across v7x's two TensorCores.
    out = jax.block_until_ready(seq2seq_forward(enc_x, dec_x, params))
    assert out.shape == (B, S_DEC, D_OUT)
    assert jnp.allclose(out, ref, atol=1e-5, rtol=1e-5), "f32 mismatch vs reference"

    # bf16 matmul operands (valid on v5e/v6e/v7x MXUs), f32 accumulation /
    # bias / mean / tanh.
    out_bf16 = jax.block_until_ready(
        seq2seq_forward(enc_x, dec_x, params, compute_dtype=jnp.bfloat16))
    assert out_bf16.shape == (B, S_DEC, D_OUT)
    assert jnp.allclose(out_bf16, ref, atol=5e-2, rtol=5e-2), "bf16 mismatch vs reference"

    print("KERNEL_OK")
</pallas_src>

<mosaic_0001>
module attributes {stable_mosaic.version = 11 : i64} {
  func.func @_seq2seq_kernel(%arg0: i32, %arg1: memref<8x128xf32, #tpu.memory_space<vmem>>, %arg2: memref<8x128xf32, #tpu.memory_space<vmem>>, %arg3: memref<128x128xf32, #tpu.memory_space<vmem>>, %arg4: memref<1x128xf32, #tpu.memory_space<vmem>>, %arg5: memref<128x128xf32, #tpu.memory_space<vmem>>, %arg6: memref<128x128xf32, #tpu.memory_space<vmem>>, %arg7: memref<1x128xf32, #tpu.memory_space<vmem>>, %arg8: memref<128x128xf32, #tpu.memory_space<vmem>>, %arg9: memref<1x128xf32, #tpu.memory_space<vmem>>, %arg10: memref<8x128xf32, #tpu.memory_space<vmem>>) attributes {dimension_semantics = [#tpu.dimension_semantics<parallel>], iteration_bounds = array<i64: 2>, scalar_prefetch = 0 : i64, scratch_operands = 0 : i64, tpu.core_type = #tpu.core_type<tc>, window_params = [{transform_indices = @transform_0, window_bounds = array<i64: 8, 128>}, {transform_indices = @transform_1, window_bounds = array<i64: 8, 128>}, {pipeline_mode = #tpu.pipeline_mode<synchronous>, transform_indices = @transform_2, window_bounds = array<i64: 128, 128>}, {pipeline_mode = #tpu.pipeline_mode<synchronous>, transform_indices = @transform_3, window_bounds = array<i64: 1, 128>}, {pipeline_mode = #tpu.pipeline_mode<synchronous>, transform_indices = @transform_4, window_bounds = array<i64: 128, 128>}, {pipeline_mode = #tpu.pipeline_mode<synchronous>, transform_indices = @transform_5, window_bounds = array<i64: 128, 128>}, {pipeline_mode = #tpu.pipeline_mode<synchronous>, transform_indices = @transform_6, window_bounds = array<i64: 1, 128>}, {pipeline_mode = #tpu.pipeline_mode<synchronous>, transform_indices = @transform_7, window_bounds = array<i64: 128, 128>}, {pipeline_mode = #tpu.pipeline_mode<synchronous>, transform_indices = @transform_8, window_bounds = array<i64: 1, 128>}, {transform_indices = @transform_9, window_bounds = array<i64: 8, 128>}]} {
    %c0 = arith.constant 0 : index
    %c0_0 = arith.constant 0 : index
    %0 = vector.load %arg1[%c0, %c0_0] : memref<8x128xf32, #tpu.memory_space<vmem>>, vector<8x128xf32>
    %c0_1 = arith.constant 0 : index
    %c0_2 = arith.constant 0 : index
    %1 = vector.load %arg3[%c0_1, %c0_2] : memref<128x128xf32, #tpu.memory_space<vmem>>, vector<128x128xf32>
    %cst = arith.constant dense<0.000000e+00> : vector<8x128xf32>
    %2 = tpu.matmul %0, %1, %cst {dimension_numbers = #tpu.dot_dimension_numbers<[1], [0], [0], [1], [0, 0, 1, 1], [], []>} : vector<8x128xf32>, vector<128x128xf32>, vector<8x128xf32> -> vector<8x128xf32>
    %c0_3 = arith.constant 0 : index
    %c0_4 = arith.constant 0 : index
    %3 = vector.load %arg4[%c0_3, %c0_4] : memref<1x128xf32, #tpu.memory_space<vmem>>, vector<1x128xf32>
    %4 = vector.broadcast %3 : vector<1x128xf32> to vector<8x128xf32>
    %5 = arith.addf %2, %4 : vector<8x128xf32>
    %6 = math.tanh %5 : vector<8x128xf32>
    %7 = vector.shape_cast %6 : vector<8x128xf32> to vector<1x8x128xf32>
    %cst_5 = arith.constant dense<0.000000e+00> : vector<1x128xf32>
    %8 = vector.multi_reduction <add>, %7, %cst_5 [1] : vector<1x8x128xf32> to vector<1x128xf32>
    %cst_6 = arith.constant 1.250000e-01 : f32
    %9 = vector.broadcast %cst_6 : f32 to vector<1x128xf32>
    %10 = arith.mulf %8, %9 : vector<1x128xf32>
    %c0_7 = arith.constant 0 : index
    %c0_8 = arith.constant 0 : index
    %11 = vector.load %arg2[%c0_7, %c0_8] : memref<8x128xf32, #tpu.memory_space<vmem>>, vector<8x128xf32>
    %c0_9 = arith.constant 0 : index
    %c0_10 = arith.constant 0 : index
    %12 = vector.load %arg5[%c0_9, %c0_10] : memref<128x128xf32, #tpu.memory_space<vmem>>, vector<128x128xf32>
    %cst_11 = arith.constant dense<0.000000e+00> : vector<8x128xf32>
    %13 = tpu.matmul %11, %12, %cst_11 {dimension_numbers = #tpu.dot_dimension_numbers<[1], [0], [0], [1], [0, 0, 1, 1], [], []>} : vector<8x128xf32>, vector<128x128xf32>, vector<8x128xf32> -> vector<8x128xf32>
    %c0_12 = arith.constant 0 : index
    %c0_13 = arith.constant 0 : index
    %14 = vector.load %arg6[%c0_12, %c0_13] : memref<128x128xf32, #tpu.memory_space<vmem>>, vector<128x128xf32>
    %cst_14 = arith.constant dense<0.000000e+00> : vector<1x128xf32>
    %15 = tpu.matmul %10, %14, %cst_14 {dimension_numbers = #tpu.dot_dimension_numbers<[1], [0], [0], [1], [0, 0, 1, 1], [], []>} : vector<1x128xf32>, vector<128x128xf32>, vector<1x128xf32> -> vector<1x128xf32>
    %16 = vector.shape_cast %15 : vector<1x128xf32> to vector<1x1x128xf32>
    %17 = vector.shape_cast %16 : vector<1x1x128xf32> to vector<1x1x128xf32>
    %18 = vector.broadcast %17 : vector<1x1x128xf32> to vector<1x8x128xf32>
    %19 = vector.shape_cast %18 : vector<1x8x128xf32> to vector<8x128xf32>
    %20 = arith.addf %13, %19 : vector<8x128xf32>
    %c0_15 = arith.constant 0 : index
    %c0_16 = arith.constant 0 : index
    %21 = vector.load %arg7[%c0_15, %c0_16] : memref<1x128xf32, #tpu.memory_space<vmem>>, vector<1x128xf32>
    %22 = vector.broadcast %21 : vector<1x128xf32> to vector<8x128xf32>
    %23 = arith.addf %20, %22 : vector<8x128xf32>
    %24 = math.tanh %23 : vector<8x128xf32>
    %c0_17 = arith.constant 0 : index
    %c0_18 = arith.constant 0 : index
    %25 = vector.load %arg8[%c0_17, %c0_18] : memref<128x128xf32, #tpu.memory_space<vmem>>, vector<128x128xf32>
    %cst_19 = arith.constant dense<0.000000e+00> : vector<8x128xf32>
    %26 = tpu.matmul %24, %25, %cst_19 {dimension_numbers = #tpu.dot_dimension_numbers<[1], [0], [0], [1], [0, 0, 1, 1], [], []>} : vector<8x128xf32>, vector<128x128xf32>, vector<8x128xf32> -> vector<8x128xf32>
    %c0_20 = arith.constant 0 : index
    %c0_21 = arith.constant 0 : index
    %27 = vector.load %arg9[%c0_20, %c0_21] : memref<1x128xf32, #tpu.memory_space<vmem>>, vector<1x128xf32>
    %28 = vector.broadcast %27 : vector<1x128xf32> to vector<8x128xf32>
    %29 = arith.addf %26, %28 : vector<8x128xf32>
    %c0_22 = arith.constant 0 : index
    %c0_23 = arith.constant 0 : index
    %30 = vector.load %arg10[%c0_22, %c0_23] : memref<8x128xf32, #tpu.memory_space<vmem>>, vector<8x128xf32>
    tpu.vector_store %arg10[%c0_22, %c0_23], %29 {strides = array<i32>} : memref<8x128xf32, #tpu.memory_space<vmem>>, vector<8x128xf32>,
    return
  }
  func.func @transform_0(%arg0: i32) -> (i32, i32) {
    %c0_i32 = arith.constant 0 : i32
    %c0_i32_0 = arith.constant 0 : i32
    return %arg0, %c0_i32 : i32, i32
  }
  func.func @transform_1(%arg0: i32) -> (i32, i32) {
    %c0_i32 = arith.constant 0 : i32
    %c0_i32_0 = arith.constant 0 : i32
    return %arg0, %c0_i32 : i32, i32
  }
  func.func @transform_2(%arg0: i32) -> (i32, i32) {
    %c0_i32 = arith.constant 0 : i32
    %c0_i32_0 = arith.constant 0 : i32
    %c0_i32_1 = arith.constant 0 : i32
    return %c0_i32, %c0_i32_0 : i32, i32
  }
  func.func @transform_3(%arg0: i32) -> (i32, i32) {
    %c0_i32 = arith.constant 0 : i32
    %c0_i32_0 = arith.constant 0 : i32
    %c0_i32_1 = arith.constant 0 : i32
    return %c0_i32, %c0_i32_0 : i32, i32
  }
  func.func @transform_4(%arg0: i32) -> (i32, i32) {
    %c0_i32 = arith.constant 0 : i32
    %c0_i32_0 = arith.constant 0 : i32
    %c0_i32_1 = arith.constant 0 : i32
    return %c0_i32, %c0_i32_0 : i32, i32
  }
  func.func @transform_5(%arg0: i32) -> (i32, i32) {
    %c0_i32 = arith.constant 0 : i32
    %c0_i32_0 = arith.constant 0 : i32
    %c0_i32_1 = arith.constant 0 : i32
    return %c0_i32, %c0_i32_0 : i32, i32
  }
  func.func @transform_6(%arg0: i32) -> (i32, i32) {
    %c0_i32 = arith.constant 0 : i32
    %c0_i32_0 = arith.constant 0 : i32
    %c0_i32_1 = arith.constant 0 : i32
    return %c0_i32, %c0_i32_0 : i32, i32
  }
  func.func @transform_7(%arg0: i32) -> (i32, i32) {
    %c0_i32 = arith.constant 0 : i32
    %c0_i32_0 = arith.constant 0 : i32
    %c0_i32_1 = arith.constant 0 : i32
    return %c0_i32, %c0_i32_0 : i32, i32
  }
  func.func @transform_8(%arg0: i32) -> (i32, i32) {
    %c0_i32 = arith.constant 0 : i32
    %c0_i32_0 = arith.constant 0 : i32
    %c0_i32_1 = arith.constant 0 : i32
    return %c0_i32, %c0_i32_0 : i32, i32
  }
  func.func @transform_9(%arg0: i32) -> (i32, i32) {
    %c0_i32 = arith.constant 0 : i32
    %c0_i32_0 = arith.constant 0 : i32
    return %arg0, %c0_i32 : i32, i32
  }
}

</mosaic_0001>

<llo_original>
// kernel: tpu_custom_call.1
$region0: #{tpu_custom_call.1}
  #allocation0 [shape = 'u32[]', space=smem, size = 0x4, offset = 0x4, fixed_abs, tag = 'smem constant byte address 0x4 - core index']
  #allocation1 [shape = 'u32[144,128]{1,0:T(1,128)}', space=vmem, size = 0x12000, scoped, tag = 'internal scratch']
  %s0 = inlined_call_operand.hbm [shape: f32[16,128], index: 0, kind: input, shape index: {}]
  %s1 = inlined_call_operand.hbm [shape: f32[16,128], index: 1, kind: input, shape index: {}]
  %s2 = inlined_call_operand.hbm [shape: f32[128,128], index: 2, kind: input, shape index: {}]
  %s3 = inlined_call_operand.vmem [shape: f32[1,128], index: 3, kind: input, shape index: {}]
  %s4 = inlined_call_operand.hbm [shape: f32[128,128], index: 4, kind: input, shape index: {}]
  %s5 = inlined_call_operand.hbm [shape: f32[128,128], index: 5, kind: input, shape index: {}]
  %s6 = inlined_call_operand.vmem [shape: f32[1,128], index: 6, kind: input, shape index: {}]
  %s7 = inlined_call_operand.hbm [shape: f32[128,128], index: 7, kind: input, shape index: {}]
  %s8 = inlined_call_operand.vmem [shape: f32[1,128], index: 8, kind: input, shape index: {}]
  %s9 = inlined_call_operand.hbm [shape: f32[16,128], index: 9, kind: output, shape index: {}]
  %s10 = sld [smem:[#allocation0]]
  $region93: #{tpu_custom_call.1} parent=0
    _
  %s12 = ssub.s32 1, %s10
  %s13 = scalar_select 0, %s12, %s10
  $region1: #{tpu_custom_call.1} parent=0
    #allocation2 [shape = 'u8[8192]{0}', space=vmem, size = 0x2000, scoped, tag = 'input window, operand 0']
    #allocation3 [shape = 's32[2]{0}', space=sflag, size = 0x8, scoped, tag = 'scoped memory for tpu_custom_call.1']
    #allocation4 [shape = 's32[2]{0}', space=sflag, size = 0x8, scoped, tag = 'scoped memory for tpu_custom_call.1']
    #allocation5 [shape = 'u8[8192]{0}', space=vmem, size = 0x2000, scoped, tag = 'input window, operand 1']
    #allocation6 [shape = 's32[2]{0}', space=sflag, size = 0x8, scoped, tag = 'scoped memory for tpu_custom_call.1']
    #allocation7 [shape = 'u8[65536]{0}', space=vmem, size = 0x10000, scoped, tag = 'input window, operand 2, single buffered']
    #allocation8 [shape = 'u8[65536]{0}', space=vmem, size = 0x10000, scoped, tag = 'input window, operand 4, single buffered']
    #allocation9 [shape = 's32[1]{0}', space=sflag, size = 0x4, scoped, tag = 'scoped memory for tpu_custom_call.1']
    #allocation10 [shape = 'u8[65536]{0}', space=vmem, size = 0x10000, scoped, tag = 'input window, operand 5, single buffered']
    #allocation11 [shape = 'u8[65536]{0}', space=vmem, size = 0x10000, scoped, tag = 'input window, operand 7, single buffered']
    #allocation12 [shape = 's32[1]{0}', space=sflag, size = 0x4, scoped, tag = 'scoped memory for tpu_custom_call.1']
    #allocation13 [shape = 'u8[8192]{0}', space=vmem, size = 0x2000, scoped, tag = 'output window, operand 0']
    %14 = vsyncpa [#allocation3], 0
    %s15 = scalar_lea.sflag [#allocation3], 1
    %16 = vsyncpa %s15, 0
    %17 = vsyncpa [#allocation6], 0
    %s18 = scalar_lea.sflag [#allocation6], 1
    %19 = vsyncpa %s18, 0
    %20 = vsyncpa [#allocation9], 0
    %21 = vsyncpa [#allocation12], 0
    %22 = vsyncpa [#allocation4], 0
    %s23 = scalar_lea.sflag [#allocation4], 1
    %24 = vsyncpa %s23, 0
    loop: start=0, step=1, limit=4
    $region2: #{tpu_custom_call.1} parent=1 // loop_pre_header
      _
    $region3: #{tpu_custom_call.1} parent=1 // loop_header
      %s26 = sphi 0, %s30
      %p27 = scmp.ge.s32.totalorder %s26, 4
      %s36 = sphi 0, %s38
      %s39 = sphi 0, %s36
      %s40 = sphi 0, %s39
      %s56 = sphi 0, %s40
      %s62 = sphi 0, %s64
      %s65 = sphi 0, %s62
      %s66 = sphi 0, %s65
      %s82 = sphi 0, %s66
      %s86 = sphi 0, %s86
      %s88 = sphi 0, %s86
      %s89 = sphi 0, %s88
      %s103 = sphi 0, %s89
      %s107 = sphi 0, %s107
      %s109 = sphi 0, %s107
      %s110 = sphi 0, %s109
      %s124 = sphi 0, %s110
      %s128 = sphi 0, %s128
      %s130 = sphi 0, %s128
      %s131 = sphi 0, %s130
      %s145 = sphi 0, %s131
      %s149 = sphi 0, %s149
      %s151 = sphi 0, %s149
      %s152 = sphi 0, %s151
      %s166 = sphi 0, %s152
      %s170 = sphi 0, %s170
      %s172 = sphi 0, %s170
      %s173 = sphi 0, %s172
      %s187 = sphi 0, %s173
      %s191 = sphi 0, %s191
      %s193 = sphi 0, %s191
      %s194 = sphi 0, %s193
      %s208 = sphi 0, %s194
      %s212 = sphi 0, %s212
      %s214 = sphi 0, %s212
      %s215 = sphi 0, %s214
      %s229 = sphi 0, %s215
      %s235 = sphi 0, %s237
      %s238 = sphi 0, %s235
      %s239 = sphi 0, %s238
      %s255 = sphi 0, %s239
    $region4: #{tpu_custom_call.1} parent=1 // loop_header_branch
      %29 = sbr.rel (%p27) target = $region8
    $region5: #{tpu_custom_call.1} parent=1 // loop_body
      %s31 = ssub.s32 %s26, 1
      %s32 = ssub.s32 %s26, 2
      %s33 = sadd.s32 %s26, 1
      %s34 = ssub.s32 %s26, %s33
      %p35 = scmp.eq.s32.totalorder %s34, 0
      %s37 = sadd.s32 %s36, 1
      %s38 = scalar_select %p35, %s36, %s37
      %p41 = pneg %p35
      %p42 = scmp.eq.s32.totalorder %s26, 1
      %p43 = por %p41, %p42
      %p44 = scmp.ne.s32.totalorder %s36, %s39
      %p45 = scmp.eq.s32.totalorder %s26, 0
      %p46 = por %p44, %p45
      %p47 = scmp.ne.s32.totalorder %s36, %s39
      %p48 = scmp.eq.s32.totalorder %s31, 1
      %p49 = por %p47, %p48
      %p50 = scmp.ne.s32.totalorder %s39, %s40
      %p51 = scmp.eq.s32.totalorder %s31, 0
      %p52 = por %p50, %p51
      %p53 = scmp.ne.s32.totalorder %s39, %s40
      %p54 = scmp.eq.s32.totalorder %s32, 1
      %p55 = por %p53, %p54
      %p57 = scmp.ne.s32.totalorder %s40, %s56
      %p58 = scmp.eq.s32.totalorder %s32, 0
      %p59 = por %p57, %p58
      %s60 = ssub.s32 %s26, %s33
      %p61 = scmp.eq.s32.totalorder %s60, 0
      %s63 = sadd.s32 %s62, 1
      %s64 = scalar_select %p61, %s62, %s63
      %p67 = pneg %p61
      %p68 = scmp.eq.s32.totalorder %s26, 1
      %p69 = por %p67, %p68
      %p70 = scmp.ne.s32.totalorder %s62, %s65
      %p71 = scmp.eq.s32.totalorder %s26, 0
      %p72 = por %p70, %p71
      %p73 = scmp.ne.s32.totalorder %s62, %s65
      %p74 = scmp.eq.s32.totalorder %s31, 1
      %p75 = por %p73, %p74
      %p76 = scmp.ne.s32.totalorder %s65, %s66
      %p77 = scmp.eq.s32.totalorder %s31, 0
      %p78 = por %p76, %p77
      %p79 = scmp.ne.s32.totalorder %s65, %s66
      %p80 = scmp.eq.s32.totalorder %s32, 1
      %p81 = por %p79, %p80
      %p83 = scmp.ne.s32.totalorder %s66, %s82
      %p84 = scmp.eq.s32.totalorder %s32, 0
      %p85 = por %p83, %p84
      %s87 = sadd.s32 %s86, 1
      %p90 = scmp.eq.s32.totalorder %s26, 1
      %p91 = scmp.ne.s32.totalorder %s86, %s88
      %p92 = scmp.eq.s32.totalorder %s26, 0
      %p93 = por %p91, %p92
      %p94 = scmp.ne.s32.totalorder %s86, %s88
      %p95 = scmp.eq.s32.totalorder %s31, 1
      %p96 = por %p94, %p95
      %p97 = scmp.ne.s32.totalorder %s88, %s89
      %p98 = scmp.eq.s32.totalorder %s31, 0
      %p99 = por %p97, %p98
      %p100 = scmp.ne.s32.totalorder %s88, %s89
      %p101 = scmp.eq.s32.totalorder %s32, 1
      %p102 = por %p100, %p101
      %p104 = scmp.ne.s32.totalorder %s89, %s103
      %p105 = scmp.eq.s32.totalorder %s32, 0
      %p106 = por %p104, %p105
      %s108 = sadd.s32 %s107, 1
      %p111 = scmp.eq.s32.totalorder %s26, 1
      %p112 = scmp.ne.s32.totalorder %s107, %s109
      %p113 = scmp.eq.s32.totalorder %s26, 0
      %p114 = por %p112, %p113
      %p115 = scmp.ne.s32.totalorder %s107, %s109
      %p116 = scmp.eq.s32.totalorder %s31, 1
      %p117 = por %p115, %p116
      %p118 = scmp.ne.s32.totalorder %s109, %s110
      %p119 = scmp.eq.s32.totalorder %s31, 0
      %p120 = por %p118, %p119
      %p121 = scmp.ne.s32.totalorder %s109, %s110
      %p122 = scmp.eq.s32.totalorder %s32, 1
      %p123 = por %p121, %p122
      %p125 = scmp.ne.s32.totalorder %s110, %s124
      %p126 = scmp.eq.s32.totalorder %s32, 0
      %p127 = por %p125, %p126
      %s129 = sadd.s32 %s128, 1
      %p132 = scmp.eq.s32.totalorder %s26, 1
      %p133 = scmp.ne.s32.totalorder %s128, %s130
      %p134 = scmp.eq.s32.totalorder %s26, 0
      %p135 = por %p133, %p134
      %p136 = scmp.ne.s32.totalorder %s128, %s130
      %p137 = scmp.eq.s32.totalorder %s31, 1
      %p138 = por %p136, %p137
      %p139 = scmp.ne.s32.totalorder %s130, %s131
      %p140 = scmp.eq.s32.totalorder %s31, 0
      %p141 = por %p139, %p140
      %p142 = scmp.ne.s32.totalorder %s130, %s131
      %p143 = scmp.eq.s32.totalorder %s32, 1
      %p144 = por %p142, %p143
      %p146 = scmp.ne.s32.totalorder %s131, %s145
      %p147 = scmp.eq.s32.totalorder %s32, 0
      %p148 = por %p146, %p147
      %s150 = sadd.s32 %s149, 1
      %p153 = scmp.eq.s32.totalorder %s26, 1
      %p154 = scmp.ne.s32.totalorder %s149, %s151
      %p155 = scmp.eq.s32.totalorder %s26, 0
      %p156 = por %p154, %p155
      %p157 = scmp.ne.s32.totalorder %s149, %s151
      %p158 = scmp.eq.s32.totalorder %s31, 1
      %p159 = por %p157, %p158
      %p160 = scmp.ne.s32.totalorder %s151, %s152
      %p161 = scmp.eq.s32.totalorder %s31, 0
      %p162 = por %p160, %p161
      %p163 = scmp.ne.s32.totalorder %s151, %s152
      %p164 = scmp.eq.s32.totalorder %s32, 1
      %p165 = por %p163, %p164
      %p167 = scmp.ne.s32.totalorder %s152, %s166
      %p168 = scmp.eq.s32.totalorder %s32, 0
      %p169 = por %p167, %p168
      %s171 = sadd.s32 %s170, 1
      %p174 = scmp.eq.s32.totalorder %s26, 1
      %p175 = scmp.ne.s32.totalorder %s170, %s172
      %p176 = scmp.eq.s32.totalorder %s26, 0
      %p177 = por %p175, %p176
      %p178 = scmp.ne.s32.totalorder %s170, %s172
      %p179 = scmp.eq.s32.totalorder %s31, 1
      %p180 = por %p178, %p179
      %p181 = scmp.ne.s32.totalorder %s172, %s173
      %p182 = scmp.eq.s32.totalorder %s31, 0
      %p183 = por %p181, %p182
      %p184 = scmp.ne.s32.totalorder %s172, %s173
      %p185 = scmp.eq.s32.totalorder %s32, 1
      %p186 = por %p184, %p185
      %p188 = scmp.ne.s32.totalorder %s173, %s187
      %p189 = scmp.eq.s32.totalorder %s32, 0
      %p190 = por %p188, %p189
      %s192 = sadd.s32 %s191, 1
      %p195 = scmp.eq.s32.totalorder %s26, 1
      %p196 = scmp.ne.s32.totalorder %s191, %s193
      %p197 = scmp.eq.s32.totalorder %s26, 0
      %p198 = por %p196, %p197
      %p199 = scmp.ne.s32.totalorder %s191, %s193
      %p200 = scmp.eq.s32.totalorder %s31, 1
      %p201 = por %p199, %p200
      %p202 = scmp.ne.s32.totalorder %s193, %s194
      %p203 = scmp.eq.s32.totalorder %s31, 0
      %p204 = por %p202, %p203
      %p205 = scmp.ne.s32.totalorder %s193, %s194
      %p206 = scmp.eq.s32.totalorder %s32, 1
      %p207 = por %p205, %p206
      %p209 = scmp.ne.s32.totalorder %s194, %s208
      %p210 = scmp.eq.s32.totalorder %s32, 0
      %p211 = por %p209, %p210
      %s213 = sadd.s32 %s212, 1
      %p216 = scmp.eq.s32.totalorder %s26, 1
      %p217 = scmp.ne.s32.totalorder %s212, %s214
      %p218 = scmp.eq.s32.totalorder %s26, 0
      %p219 = por %p217, %p218
      %p220 = scmp.ne.s32.totalorder %s212, %s214
      %p221 = scmp.eq.s32.totalorder %s31, 1
      %p222 = por %p220, %p221
      %p223 = scmp.ne.s32.totalorder %s214, %s215
      %p224 = scmp.eq.s32.totalorder %s31, 0
      %p225 = por %p223, %p224
      %p226 = scmp.ne.s32.totalorder %s214, %s215
      %p227 = scmp.eq.s32.totalorder %s32, 1
      %p228 = por %p226, %p227
      %p230 = scmp.ne.s32.totalorder %s215, %s229
      %p231 = scmp.eq.s32.totalorder %s32, 0
      %p232 = por %p230, %p231
      %s233 = ssub.s32 %s26, %s33
      %p234 = scmp.eq.s32.totalorder %s233, 0
      %s236 = sadd.s32 %s235, 1
      %s237 = scalar_select %p234, %s235, %s236
      %p240 = pneg %p234
      %p241 = scmp.eq.s32.totalorder %s26, 1
      %p242 = por %p240, %p241
      %p243 = scmp.ne.s32.totalorder %s235, %s238
      %p244 = scmp.eq.s32.totalorder %s26, 0
      %p245 = por %p243, %p244
      %p246 = scmp.ne.s32.totalorder %s235, %s238
      %p247 = scmp.eq.s32.totalorder %s31, 1
      %p248 = por %p246, %p247
      %p249 = scmp.ne.s32.totalorder %s238, %s239
      %p250 = scmp.eq.s32.totalorder %s31, 0
      %p251 = por %p249, %p250
      %p252 = scmp.ne.s32.totalorder %s238, %s239
      %p253 = scmp.eq.s32.totalorder %s32, 1
      %p254 = por %p252, %p253
      %p256 = scmp.ne.s32.totalorder %s239, %s255
      %p257 = scmp.eq.s32.totalorder %s32, 0
      %p258 = por %p256, %p257
      %p259 = scmp.le.s32.totalorder 1, %s26
      %p260 = scmp.lt.s32.totalorder %s26, 3
      %p261 = pnand %p259, %p260
      %p262 = pneg %p261
      // Predicated region
      $region9: #{tpu_custom_call.1} parent=5 // pred_check
        _
      $region10: #{tpu_custom_call.1} parent=5 // pred_check_branch
        %264 = sbr.rel (%p261) target = $region12
      $region11: #{tpu_custom_call.1} parent=5 // pred_region
        %s265 = ssub.s32 %s26, 1
        // Predicated region
        $region13: #{tpu_custom_call.1} parent=11 // pred_check
          %p266 = pneg %p99
        $region14: #{tpu_custom_call.1} parent=11 // pred_check_branch
          %268 = sbr.rel (%p266) target = $region16
        $region15: #{tpu_custom_call.1} parent=11 // pred_region
          %s270 = ssub.s32 2048, 2048
          %271 = vsyncadd [#allocation6], %s270
          %s272 = sshll.u32 [#allocation7], 4
          %s273 = int_to_ptr.vmem [resolvable:$true] %s272
          %278 = dma.hbm_to_vmem [thread:$0]  %s2, 2048, %s273, [#allocation6], 128, 128, 8
        $region16: #{tpu_custom_call.1} parent=11 // pred_fallthru
          _
        // Predicated region
        $region17: #{tpu_custom_call.1} parent=11 // pred_check
          %p279 = pneg %p120
        $region18: #{tpu_custom_call.1} parent=11 // pred_check_branch
          %281 = sbr.rel (%p279) target = $region20
        $region19: #{tpu_custom_call.1} parent=11 // pred_region
          _
        $region20: #{tpu_custom_call.1} parent=11 // pred_fallthru
          _
        // Predicated region
        $region21: #{tpu_custom_call.1} parent=11 // pred_check
          %p282 = pneg %p141
        $region22: #{tpu_custom_call.1} parent=11 // pred_check_branch
          %284 = sbr.rel (%p282) target = $region24
        $region23: #{tpu_custom_call.1} parent=11 // pred_region
          %s286 = ssub.s32 2048, 2048
          %287 = vsyncadd [#allocation9], %s286
          %s288 = sshll.u32 [#allocation8], 4
          %s289 = int_to_ptr.vmem [resolvable:$true] %s288
          %294 = dma.hbm_to_vmem [thread:$0]  %s4, 2048, %s289, [#allocation9], 128, 128, 8
        $region24: #{tpu_custom_call.1} parent=11 // pred_fallthru
          _
        // Predicated region
        $region25: #{tpu_custom_call.1} parent=11 // pred_check
          %p295 = pneg %p162
        $region26: #{tpu_custom_call.1} parent=11 // pred_check_branch
          %297 = sbr.rel (%p295) target = $region28
        $region27: #{tpu_custom_call.1} parent=11 // pred_region
          %s299 = ssub.s32 2048, 2048
          %300 = vsyncadd [#allocation9], %s299
          %s301 = sshll.u32 [#allocation10], 4
          %s302 = int_to_ptr.vmem [resolvable:$true] %s301
          %307 = dma.hbm_to_vmem [thread:$0]  %s5, 2048, %s302, [#allocation9], 128, 128, 8
        $region28: #{tpu_custom_call.1} parent=11 // pred_fallthru
          _
        // Predicated region
        $region29: #{tpu_custom_call.1} parent=11 // pred_check
          %p308 = pneg %p183
        $region30: #{tpu_custom_call.1} parent=11 // pred_check_branch
          %310 = sbr.rel (%p308) target = $region32
        $region31: #{tpu_custom_call.1} parent=11 // pred_region
          _
        $region32: #{tpu_custom_call.1} parent=11 // pred_fallthru
          _
        // Predicated region
        $region33: #{tpu_custom_call.1} parent=11 // pred_check
          %p311 = pneg %p204
        $region34: #{tpu_custom_call.1} parent=11 // pred_check_branch
          %313 = sbr.rel (%p311) target = $region36
        $region35: #{tpu_custom_call.1} parent=11 // pred_region
          %s315 = ssub.s32 2048, 2048
          %316 = vsyncadd [#allocation12], %s315
          %s317 = sshll.u32 [#allocation11], 4
          %s318 = int_to_ptr.vmem [resolvable:$true] %s317
          %323 = dma.hbm_to_vmem [thread:$0]  %s7, 2048, %s318, [#allocation12], 128, 128, 8
        $region36: #{tpu_custom_call.1} parent=11 // pred_fallthru
          _
        // Predicated region
        $region37: #{tpu_custom_call.1} parent=11 // pred_check
          %p324 = pneg %p225
        $region38: #{tpu_custom_call.1} parent=11 // pred_check_branch
          %326 = sbr.rel (%p324) target = $region40
        $region39: #{tpu_custom_call.1} parent=11 // pred_region
          _
        $region40: #{tpu_custom_call.1} parent=11 // pred_fallthru
          _
      $region12: #{tpu_custom_call.1} parent=5 // pred_fallthru
        _
      %p327 = scmp.lt.s32.totalorder %s26, 2
      // Predicated region
      $region41: #{tpu_custom_call.1} parent=5 // pred_check
        %p328 = pneg %p327
      $region42: #{tpu_custom_call.1} parent=5 // pred_check_branch
        %330 = sbr.rel (%p328) target = $region44
      $region43: #{tpu_custom_call.1} parent=5 // pred_region
        // Predicated region
        $region45: #{tpu_custom_call.1} parent=43 // pred_check
          %p331 = pneg %p46
        $region46: #{tpu_custom_call.1} parent=43 // pred_check_branch
          %333 = sbr.rel (%p331) target = $region48
        $region47: #{tpu_custom_call.1} parent=43 // pred_region
          %s334 = sand.u32 %s36, 1
          %s335 = scalar_lea.sflag [#allocation3], %s334
          %s336 = sand.u32 %s36, 1
          %s337 = smul.addr %s336, 8
          %s338 = scalar_lea.vmem [#allocation2], %s337
          %s340 = ssub.s32 128, 128
          %341 = vsyncadd %s335, %s340
          %s342 = smul.addr %s26, 128
          %s343 = scalar_lea.hbm %s0, %s342
          %s345 = sshll.u32 %s338, 4
          %s346 = int_to_ptr.vmem [resolvable:$true] %s345
          %348 = dma.hbm_to_vmem [thread:$0]  %s343, 128, %s346, %s335
        $region48: #{tpu_custom_call.1} parent=43 // pred_fallthru
          _
        // Predicated region
        $region49: #{tpu_custom_call.1} parent=43 // pred_check
          %p349 = pneg %p72
        $region50: #{tpu_custom_call.1} parent=43 // pred_check_branch
          %351 = sbr.rel (%p349) target = $region52
        $region51: #{tpu_custom_call.1} parent=43 // pred_region
          %s352 = sand.u32 %s26, 1
          %s353 = scalar_lea.sflag [#allocation6], %s352
          %s354 = sand.u32 %s62, 1
          %s355 = smul.addr %s354, 8
          %s356 = scalar_lea.vmem [#allocation5], %s355
          %s358 = ssub.s32 128, 128
          %359 = vsyncadd %s353, %s358
          %s360 = smul.addr %s26, 128
          %s361 = scalar_lea.hbm %s1, %s360
          %s363 = sshll.u32 %s356, 4
          %s364 = int_to_ptr.vmem [resolvable:$true] %s363
          %366 = dma.hbm_to_vmem [thread:$0]  %s361, 128, %s364, %s353
        $region52: #{tpu_custom_call.1} parent=43 // pred_fallthru
          _
      $region44: #{tpu_custom_call.1} parent=5 // pred_fallthru
        _
      %p367 = scmp.le.s32.totalorder 1, %s26
      %p368 = scmp.lt.s32.totalorder %s26, 3
      %p369 = pnand %p367, %p368
      %p370 = pneg %p369
      // Predicated region
      $region53: #{tpu_custom_call.1} parent=5 // pred_check
        _
      $region54: #{tpu_custom_call.1} parent=5 // pred_check_branch
        %372 = sbr.rel (%p369) target = $region56
      $region55: #{tpu_custom_call.1} parent=5 // pred_region
        %s373 = ssub.s32 %s26, 1
        %s374 = sand.u32 %s39, 1
        %s375 = scalar_lea.sflag [#allocation3], %s374
        %s376 = sand.u32 %s39, 1
        %s377 = smul.addr %s376, 8
        %s378 = scalar_lea.vmem [#allocation2], %s377
        // Predicated region
        $region57: #{tpu_custom_call.1} parent=55 // pred_check
          %p379 = pneg %p52
        $region58: #{tpu_custom_call.1} parent=55 // pred_check_branch
          %381 = sbr.rel (%p379) target = $region60
        $region59: #{tpu_custom_call.1} parent=55 // pred_region
          %382 = dma.done %s375, 128
        $region60: #{tpu_custom_call.1} parent=55 // pred_fallthru
          _
        %s383 = sand.u32 %s31, 1
        %s384 = scalar_lea.sflag [#allocation6], %s383
        %s385 = sand.u32 %s65, 1
        %s386 = smul.addr %s385, 8
        %s387 = scalar_lea.vmem [#allocation5], %s386
        // Predicated region
        $region61: #{tpu_custom_call.1} parent=55 // pred_check
          %p388 = pneg %p78
        $region62: #{tpu_custom_call.1} parent=55 // pred_check_branch
          %390 = sbr.rel (%p388) target = $region64
        $region63: #{tpu_custom_call.1} parent=55 // pred_region
          %391 = dma.done %s384, 128
        $region64: #{tpu_custom_call.1} parent=55 // pred_fallthru
          _
        // Predicated region
        $region65: #{tpu_custom_call.1} parent=55 // pred_check
          %p392 = pneg %p99
        $region66: #{tpu_custom_call.1} parent=55 // pred_check_branch
          %394 = sbr.rel (%p392) target = $region68
        $region67: #{tpu_custom_call.1} parent=55 // pred_region
          %395 = dma.done [#allocation6], 2048
        $region68: #{tpu_custom_call.1} parent=55 // pred_fallthru
          _
        // Predicated region
        $region69: #{tpu_custom_call.1} parent=55 // pred_check
          %p396 = pneg %p141
        $region70: #{tpu_custom_call.1} parent=55 // pred_check_branch
          %398 = sbr.rel (%p396) target = $region72
        $region71: #{tpu_custom_call.1} parent=55 // pred_region
          %399 = dma.done [#allocation9], 2048
        $region72: #{tpu_custom_call.1} parent=55 // pred_fallthru
          _
        // Predicated region
        $region73: #{tpu_custom_call.1} parent=55 // pred_check
          %p400 = pneg %p162
        $region74: #{tpu_custom_call.1} parent=55 // pred_check_branch
          %402 = sbr.rel (%p400) target = $region76
        $region75: #{tpu_custom_call.1} parent=55 // pred_region
          %403 = dma.done [#allocation9], 2048
        $region76: #{tpu_custom_call.1} parent=55 // pred_fallthru
          _
        // Predicated region
        $region77: #{tpu_custom_call.1} parent=55 // pred_check
          %p404 = pneg %p204
        $region78: #{tpu_custom_call.1} parent=55 // pred_check_branch
          %406 = sbr.rel (%p404) target = $region80
        $region79: #{tpu_custom_call.1} parent=55 // pred_region
          %407 = dma.done [#allocation12], 2048
        $region80: #{tpu_custom_call.1} parent=55 // pred_fallthru
          _
        %s408 = sand.u32 %s39, 1
        %s409 = scalar_lea.sflag [#allocation3], %s408
        %s410 = sand.u32 %s39, 1
        %s411 = smul.addr %s410, 8
        %s412 = scalar_lea.vmem [#allocation2], %s411
        %p413 = pneg %p52
        %p414 = pneg %p49
        %s415 = sand.u32 %s31, 1
        %s416 = scalar_lea.sflag [#allocation6], %s415
        %s417 = sand.u32 %s65, 1
        %s418 = smul.addr %s417, 8
        %s419 = scalar_lea.vmem [#allocation5], %s418
        %p420 = pneg %p78
        %p421 = pneg %p75
        %p422 = pneg %p99
        %p423 = pneg %p96
        %p424 = pneg %p120
        %p425 = pneg %p117
        %p426 = pneg %p141
        %p427 = pneg %p138
        %p428 = pneg %p162
        %p429 = pneg %p159
        %p430 = pneg %p183
        %p431 = pneg %p180
        %p432 = pneg %p204
        %p433 = pneg %p201
        %p434 = pneg %p225
        %p435 = pneg %p222
        %p436 = pneg %p251
        %p437 = pneg %p248
        %s438 = sand.u32 %s238, 1
        %s439 = scalar_lea.sflag [#allocation4], %s438
        %s440 = sand.u32 %s238, 1
        %s441 = smul.addr %s440, 8
        %s442 = scalar_lea.vmem [#allocation13], %s441
        %v443 = vld [vmem:[%s378] sm:$0xff]
        %v444 = vld [vmem:[#allocation7] sm:$0xff]
        %v445 = vld [vmem:[#allocation7 + $0x8] sm:$0xff]
        %v446 = vld [vmem:[#allocation7 + $0x10] sm:$0xff]
        %v447 = vld [vmem:[#allocation7 + $0x18] sm:$0xff]
        %v448 = vld [vmem:[#allocation7 + $0x20] sm:$0xff]
        %v449 = vld [vmem:[#allocation7 + $0x28] sm:$0xff]
        %v450 = vld [vmem:[#allocation7 + $0x30] sm:$0xff]
        %v451 = vld [vmem:[#allocation7 + $0x38] sm:$0xff]
        %v452 = vld [vmem:[#allocation7 + $0x40] sm:$0xff]
        %v453 = vld [vmem:[#allocation7 + $0x48] sm:$0xff]
        %v454 = vld [vmem:[#allocation7 + $0x50] sm:$0xff]
        %v455 = vld [vmem:[#allocation7 + $0x58] sm:$0xff]
        %v456 = vld [vmem:[#allocation7 + $0x60] sm:$0xff]
        %v457 = vld [vmem:[#allocation7 + $0x68] sm:$0xff]
        %v458 = vld [vmem:[#allocation7 + $0x70] sm:$0xff]
        %v459 = vld [vmem:[#allocation7 + $0x78] sm:$0xff]
        %v460 = vld [vmem:[%s3] sm:$0x1]
        %v462 = vlaneseq
        %v463 = vshrl.u32 %v462, 7
        %v464 = vsub.s32 0, %v463
        %v465 = vrot.slane %v460, %v464
        %467 = vmatprep.subr.mxu0 0.0
        %468 = vmatpush1.msra.mxu0 %v444
        %469 = vmatprep.subr.mxu0 0.0
        %470 = vmatpush1.msra.mxu0 %v445
        %471 = vmatprep.subr.mxu0 0.0
        %472 = vmatpush1.msra.mxu0 %v446
        %473 = vmatprep.subr.mxu0 0.0
        %474 = vmatpush1.msra.mxu0 %v447
        %475 = vmatprep.subr.mxu0 0.0
        %476 = vmatpush1.msra.mxu0 %v448
        %477 = vmatprep.subr.mxu0 0.0
        %478 = vmatpush1.msra.mxu0 %v449
        %479 = vmatprep.subr.mxu0 0.0
        %480 = vmatpush1.msra.mxu0 %v450
        %481 = vmatprep.subr.mxu0 0.0
        %482 = vmatpush1.msra.mxu0 %v451
        %483 = vmatprep.subr.mxu0 0.0
        %484 = vmatpush1.msra.mxu0 %v452
        %485 = vmatprep.subr.mxu0 0.0
        %486 = vmatpush1.msra.mxu0 %v453
        %487 = vmatprep.subr.mxu0 0.0
        %488 = vmatpush1.msra.mxu0 %v454
        %489 = vmatprep.subr.mxu0 0.0
        %490 = vmatpush1.msra.mxu0 %v455
        %491 = vmatprep.subr.mxu0 0.0
        %492 = vmatpush1.msra.mxu0 %v456
        %493 = vmatprep.subr.mxu0 0.0
        %494 = vmatpush1.msra.mxu0 %v457
        %495 = vmatprep.subr.mxu0 0.0
        %496 = vmatpush1.msra.mxu0 %v458
        %497 = vmatprep.subr.mxu0 0.0
        %498 = vmatpush1.msra.mxu0 %v459
        %499 = vmatprep.subr.mxu0 0.0
        %500 = vmatpush1.msra.mxu0 0.0
        %501 = vmatprep.subr.mxu0 0.0
        %502 = vmatpush1.msra.mxu0 0.0
        %503 = vmatprep.subr.mxu0 0.0
        %504 = vmatpush1.msra.mxu0 0.0
        %505 = vmatprep.subr.mxu0 0.0
        %506 = vmatpush1.msra.mxu0 0.0
        %507 = vmatprep.subr.mxu0 0.0
        %508 = vmatpush1.msra.mxu0 0.0
        %509 = vmatprep.subr.mxu0 0.0
        %510 = vmatpush1.msra.mxu0 0.0
        %511 = vmatprep.subr.mxu0 0.0
        %512 = vmatpush1.msra.mxu0 0.0
        %513 = vmatprep.subr.mxu0 0.0
        %514 = vmatpush1.msra.mxu0 0.0
        %515 = vmatprep.subr.mxu0 0.0
        %516 = vmatpush1.msra.mxu0 0.0
        %517 = vmatprep.subr.mxu0 0.0
        %518 = vmatpush1.msra.mxu0 0.0
        %519 = vmatprep.subr.mxu0 0.0
        %520 = vmatpush1.msra.mxu0 0.0
        %521 = vmatprep.subr.mxu0 0.0
        %522 = vmatpush1.msra.mxu0 0.0
        %523 = vmatprep.subr.mxu0 0.0
        %524 = vmatpush1.msra.mxu0 0.0
        %525 = vmatprep.subr.mxu0 0.0
        %526 = vmatpush1.msra.mxu0 0.0
        %527 = vmatprep.subr.mxu0 0.0
        %528 = vmatpush1.msra.mxu0 0.0
        %529 = vmatprep.subr.mxu0 0.0
        %530 = vmatpush1.msra.mxu0 0.0
        %531 = vmatprep.mubr.f32.mxu0 0.0
        %532 = vmatmul.mubr.f32.gmra.mrb[0].mxu0 %v443
        %v533 = vpop.f32.mrb[0].mxu0
        %v534 = vadd.f32 %v465, %v533
        %v535 = vpop.f32.mrb[0].mxu0
        %536 = vdwg.mxu0
        %v537 = vtanh.pop %v534
        %v538 = vrot.slane %v537, 4
        %v539 = vadd.f32 %v537, %v538
        %v540 = vrot.slane %v539, 2
        %v541 = vadd.f32 %v539, %v540
        %v542 = vrot.slane %v541, 1
        %v543 = vadd.f32 %v541, %v542
        %v544 = vmul.f32 %v543, 0.125
        %v545 = vld [vmem:[%s387] sm:$0xff]
        %v546 = vld [vmem:[#allocation8] sm:$0xff]
        %v547 = vld [vmem:[#allocation8 + $0x8] sm:$0xff]
        %v548 = vld [vmem:[#allocation8 + $0x10] sm:$0xff]
        %v549 = vld [vmem:[#allocation8 + $0x18] sm:$0xff]
        %v550 = vld [vmem:[#allocation8 + $0x20] sm:$0xff]
        %v551 = vld [vmem:[#allocation8 + $0x28] sm:$0xff]
        %v552 = vld [vmem:[#allocation8 + $0x30] sm:$0xff]
        %v553 = vld [vmem:[#allocation8 + $0x38] sm:$0xff]
        %v554 = vld [vmem:[#allocation8 + $0x40] sm:$0xff]
        %v555 = vld [vmem:[#allocation8 + $0x48] sm:$0xff]
        %v556 = vld [vmem:[#allocation8 + $0x50] sm:$0xff]
        %v557 = vld [vmem:[#allocation8 + $0x58] sm:$0xff]
        %v558 = vld [vmem:[#allocation8 + $0x60] sm:$0xff]
        %v559 = vld [vmem:[#allocation8 + $0x68] sm:$0xff]
        %v560 = vld [vmem:[#allocation8 + $0x70] sm:$0xff]
        %v561 = vld [vmem:[#allocation8 + $0x78] sm:$0xff]
        %v562 = vld [vmem:[#allocation10] sm:$0xff]
        %v563 = vld [vmem:[#allocation10 + $0x8] sm:$0xff]
        %v564 = vld [vmem:[#allocation10 + $0x10] sm:$0xff]
        %v565 = vld [vmem:[#allocation10 + $0x18] sm:$0xff]
        %v566 = vld [vmem:[#allocation10 + $0x20] sm:$0xff]
        %v567 = vld [vmem:[#allocation10 + $0x28] sm:$0xff]
        %v568 = vld [vmem:[#allocation10 + $0x30] sm:$0xff]
        %v569 = vld [vmem:[#allocation10 + $0x38] sm:$0xff]
        %v570 = vld [vmem:[#allocation10 + $0x40] sm:$0xff]
        %v571 = vld [vmem:[#allocation10 + $0x48] sm:$0xff]
        %v572 = vld [vmem:[#allocation10 + $0x50] sm:$0xff]
        %v573 = vld [vmem:[#allocation10 + $0x58] sm:$0xff]
        %v574 = vld [vmem:[#allocation10 + $0x60] sm:$0xff]
        %v575 = vld [vmem:[#allocation10 + $0x68] sm:$0xff]
        %v576 = vld [vmem:[#allocation10 + $0x70] sm:$0xff]
        %v577 = vld [vmem:[#allocation10 + $0x78] sm:$0xff]
        %578 = vmatprep.subr.mxu0 0.0
        %579 = vmatpush1.msra.mxu0 %v562
        %580 = vmatprep.subr.mxu0 0.0
        %581 = vmatpush1.msra.mxu0 %v563
        %582 = vmatprep.subr.mxu0 0.0
        %583 = vmatpush1.msra.mxu0 %v564
        %584 = vmatprep.subr.mxu0 0.0
        %585 = vmatpush1.msra.mxu0 %v565
        %586 = vmatprep.subr.mxu0 0.0
        %587 = vmatpush1.msra.mxu0 %v566
        %588 = vmatprep.subr.mxu0 0.0
        %589 = vmatpush1.msra.mxu0 %v567
        %590 = vmatprep.subr.mxu0 0.0
        %591 = vmatpush1.msra.mxu0 %v568
        %592 = vmatprep.subr.mxu0 0.0
        %593 = vmatpush1.msra.mxu0 %v569
        %594 = vmatprep.subr.mxu0 0.0
        %595 = vmatpush1.msra.mxu0 %v570
        %596 = vmatprep.subr.mxu0 0.0
        %597 = vmatpush1.msra.mxu0 %v571
        %598 = vmatprep.subr.mxu0 0.0
        %599 = vmatpush1.msra.mxu0 %v572
        %600 = vmatprep.subr.mxu0 0.0
        %601 = vmatpush1.msra.mxu0 %v573
        %602 = vmatprep.subr.mxu0 0.0
        %603 = vmatpush1.msra.mxu0 %v574
        %604 = vmatprep.subr.mxu0 0.0
        %605 = vmatpush1.msra.mxu0 %v575
        %606 = vmatprep.subr.mxu0 0.0
        %607 = vmatpush1.msra.mxu0 %v576
        %608 = vmatprep.subr.mxu0 0.0
        %609 = vmatpush1.msra.mxu0 %v577
        %610 = vmatprep.subr.mxu0 0.0
        %611 = vmatpush1.msra.mxu0 0.0
        %612 = vmatprep.subr.mxu0 0.0
        %613 = vmatpush1.msra.mxu0 0.0
        %614 = vmatprep.subr.mxu0 0.0
        %615 = vmatpush1.msra.mxu0 0.0
        %616 = vmatprep.subr.mxu0 0.0
        %617 = vmatpush1.msra.mxu0 0.0
        %618 = vmatprep.subr.mxu0 0.0
        %619 = vmatpush1.msra.mxu0 0.0
        %620 = vmatprep.subr.mxu0 0.0
        %621 = vmatpush1.msra.mxu0 0.0
        %622 = vmatprep.subr.mxu0 0.0
        %623 = vmatpush1.msra.mxu0 0.0
        %624 = vmatprep.subr.mxu0 0.0
        %625 = vmatpush1.msra.mxu0 0.0
        %626 = vmatprep.subr.mxu0 0.0
        %627 = vmatpush1.msra.mxu0 0.0
        %628 = vmatprep.subr.mxu0 0.0
        %629 = vmatpush1.msra.mxu0 0.0
        %630 = vmatprep.subr.mxu0 0.0
        %631 = vmatpush1.msra.mxu0 0.0
        %632 = vmatprep.subr.mxu0 0.0
        %633 = vmatpush1.msra.mxu0 0.0
        %634 = vmatprep.subr.mxu0 0.0
        %635 = vmatpush1.msra.mxu0 0.0
        %636 = vmatprep.subr.mxu0 0.0
        %637 = vmatpush1.msra.mxu0 0.0
        %638 = vmatprep.subr.mxu0 0.0
        %639 = vmatpush1.msra.mxu0 0.0
        %640 = vmatprep.subr.mxu0 0.0
        %641 = vmatpush1.msra.mxu0 0.0
        %642 = vmatprep.mubr.f32.mxu0 0.0
        %643 = vmatmul.mubr.f32.gmra.mrb[0].mxu0 %v544
        %v644 = vpop.f32.mrb[0].mxu0
        %v645 = vadd.f32 0.0, %v644
        %v646 = vpop.f32.mrb[0].mxu0
        %647 = vdwg.mxu0
        %v648 = vlaneseq
        %v649 = vshrl.u32 %v648, 7
        %v650 = vsub.s32 0, %v649
        %v651 = vrot.slane %v645, %v650
        %652 = vmatprep.subr.mxu0 0.0
        %653 = vmatpush1.msra.mxu0 %v546
        %654 = vmatprep.subr.mxu0 0.0
        %655 = vmatpush1.msra.mxu0 %v547
        %656 = vmatprep.subr.mxu0 0.0
        %657 = vmatpush1.msra.mxu0 %v548
        %658 = vmatprep.subr.mxu0 0.0
        %659 = vmatpush1.msra.mxu0 %v549
        %660 = vmatprep.subr.mxu0 0.0
        %661 = vmatpush1.msra.mxu0 %v550
        %662 = vmatprep.subr.mxu0 0.0
        %663 = vmatpush1.msra.mxu0 %v551
        %664 = vmatprep.subr.mxu0 0.0
        %665 = vmatpush1.msra.mxu0 %v552
        %666 = vmatprep.subr.mxu0 0.0
        %667 = vmatpush1.msra.mxu0 %v553
        %668 = vmatprep.subr.mxu0 0.0
        %669 = vmatpush1.msra.mxu0 %v554
        %670 = vmatprep.subr.mxu0 0.0
        %671 = vmatpush1.msra.mxu0 %v555
        %672 = vmatprep.subr.mxu0 0.0
        %673 = vmatpush1.msra.mxu0 %v556
        %674 = vmatprep.subr.mxu0 0.0
        %675 = vmatpush1.msra.mxu0 %v557
        %676 = vmatprep.subr.mxu0 0.0
        %677 = vmatpush1.msra.mxu0 %v558
        %678 = vmatprep.subr.mxu0 0.0
        %679 = vmatpush1.msra.mxu0 %v559
        %680 = vmatprep.subr.mxu0 0.0
        %681 = vmatpush1.msra.mxu0 %v560
        %682 = vmatprep.subr.mxu0 0.0
        %683 = vmatpush1.msra.mxu0 %v561
        %684 = vmatprep.subr.mxu0 0.0
        %685 = vmatpush1.msra.mxu0 0.0
        %686 = vmatprep.subr.mxu0 0.0
        %687 = vmatpush1.msra.mxu0 0.0
        %688 = vmatprep.subr.mxu0 0.0
        %689 = vmatpush1.msra.mxu0 0.0
        %690 = vmatprep.subr.mxu0 0.0
        %691 = vmatpush1.msra.mxu0 0.0
        %692 = vmatprep.subr.mxu0 0.0
        %693 = vmatpush1.msra.mxu0 0.0
        %694 = vmatprep.subr.mxu0 0.0
        %695 = vmatpush1.msra.mxu0 0.0
        %696 = vmatprep.subr.mxu0 0.0
        %697 = vmatpush1.msra.mxu0 0.0
        %698 = vmatprep.subr.mxu0 0.0
        %699 = vmatpush1.msra.mxu0 0.0
        %700 = vmatprep.subr.mxu0 0.0
        %701 = vmatpush1.msra.mxu0 0.0
        %702 = vmatprep.subr.mxu0 0.0
        %703 = vmatpush1.msra.mxu0 0.0
        %704 = vmatprep.subr.mxu0 0.0
        %705 = vmatpush1.msra.mxu0 0.0
        %706 = vmatprep.subr.mxu0 0.0
        %707 = vmatpush1.msra.mxu0 0.0
        %708 = vmatprep.subr.mxu0 0.0
        %709 = vmatpush1.msra.mxu0 0.0
        %710 = vmatprep.subr.mxu0 0.0
        %711 = vmatpush1.msra.mxu0 0.0
        %712 = vmatprep.subr.mxu0 0.0
        %713 = vmatpush1.msra.mxu0 0.0
        %714 = vmatprep.subr.mxu0 0.0
        %715 = vmatpush1.msra.mxu0 0.0
        %716 = vmatprep.mubr.f32.mxu0 0.0
        %717 = vmatmul.mubr.f32.gmra.mrb[0].mxu0 %v545
        %v718 = vpop.f32.mrb[0].mxu0
        %v719 = vadd.f32 %v651, %v718
        %v720 = vpop.f32.mrb[0].mxu0
        %721 = vdwg.mxu0
        %v722 = vld [vmem:[%s6] sm:$0x1]
        %v724 = vlaneseq
        %v725 = vshrl.u32 %v724, 7
        %v726 = vsub.s32 0, %v725
        %v727 = vrot.slane %v722, %v726
        %v729 = vadd.f32 %v719, %v727
        %v730 = vtanh.pop %v729
        %v731 = vld [vmem:[#allocation11] sm:$0xff]
        %v732 = vld [vmem:[#allocation11 + $0x8] sm:$0xff]
        %v733 = vld [vmem:[#allocation11 + $0x10] sm:$0xff]
        %v734 = vld [vmem:[#allocation11 + $0x18] sm:$0xff]
        %v735 = vld [vmem:[#allocation11 + $0x20] sm:$0xff]
        %v736 = vld [vmem:[#allocation11 + $0x28] sm:$0xff]
        %v737 = vld [vmem:[#allocation11 + $0x30] sm:$0xff]
        %v738 = vld [vmem:[#allocation11 + $0x38] sm:$0xff]
        %v739 = vld [vmem:[#allocation11 + $0x40] sm:$0xff]
        %v740 = vld [vmem:[#allocation11 + $0x48] sm:$0xff]
        %v741 = vld [vmem:[#allocation11 + $0x50] sm:$0xff]
        %v742 = vld [vmem:[#allocation11 + $0x58] sm:$0xff]
        %v743 = vld [vmem:[#allocation11 + $0x60] sm:$0xff]
        %v744 = vld [vmem:[#allocation11 + $0x68] sm:$0xff]
        %v745 = vld [vmem:[#allocation11 + $0x70] sm:$0xff]
        %v746 = vld [vmem:[#allocation11 + $0x78] sm:$0xff]
        %v747 = vld [vmem:[%s8] sm:$0x1]
        %v749 = vlaneseq
        %v750 = vshrl.u32 %v749, 7
        %v751 = vsub.s32 0, %v750
        %v752 = vrot.slane %v747, %v751
        %754 = vmatprep.subr.mxu0 0.0
        %755 = vmatpush1.msra.mxu0 %v731
        %756 = vmatprep.subr.mxu0 0.0
        %757 = vmatpush1.msra.mxu0 %v732
        %758 = vmatprep.subr.mxu0 0.0
        %759 = vmatpush1.msra.mxu0 %v733
        %760 = vmatprep.subr.mxu0 0.0
        %761 = vmatpush1.msra.mxu0 %v734
        %762 = vmatprep.subr.mxu0 0.0
        %763 = vmatpush1.msra.mxu0 %v735
        %764 = vmatprep.subr.mxu0 0.0
        %765 = vmatpush1.msra.mxu0 %v736
        %766 = vmatprep.subr.mxu0 0.0
        %767 = vmatpush1.msra.mxu0 %v737
        %768 = vmatprep.subr.mxu0 0.0
        %769 = vmatpush1.msra.mxu0 %v738
        %770 = vmatprep.subr.mxu0 0.0
        %771 = vmatpush1.msra.mxu0 %v739
        %772 = vmatprep.subr.mxu0 0.0
        %773 = vmatpush1.msra.mxu0 %v740
        %774 = vmatprep.subr.mxu0 0.0
        %775 = vmatpush1.msra.mxu0 %v741
        %776 = vmatprep.subr.mxu0 0.0
        %777 = vmatpush1.msra.mxu0 %v742
        %778 = vmatprep.subr.mxu0 0.0
        %779 = vmatpush1.msra.mxu0 %v743
        %780 = vmatprep.subr.mxu0 0.0
        %781 = vmatpush1.msra.mxu0 %v744
        %782 = vmatprep.subr.mxu0 0.0
        %783 = vmatpush1.msra.mxu0 %v745
        %784 = vmatprep.subr.mxu0 0.0
        %785 = vmatpush1.msra.mxu0 %v746
        %786 = vmatprep.subr.mxu0 0.0
        %787 = vmatpush1.msra.mxu0 0.0
        %788 = vmatprep.subr.mxu0 0.0
        %789 = vmatpush1.msra.mxu0 0.0
        %790 = vmatprep.subr.mxu0 0.0
        %791 = vmatpush1.msra.mxu0 0.0
        %792 = vmatprep.subr.mxu0 0.0
        %793 = vmatpush1.msra.mxu0 0.0
        %794 = vmatprep.subr.mxu0 0.0
        %795 = vmatpush1.msra.mxu0 0.0
        %796 = vmatprep.subr.mxu0 0.0
        %797 = vmatpush1.msra.mxu0 0.0
        %798 = vmatprep.subr.mxu0 0.0
        %799 = vmatpush1.msra.mxu0 0.0
        %800 = vmatprep.subr.mxu0 0.0
        %801 = vmatpush1.msra.mxu0 0.0
        %802 = vmatprep.subr.mxu0 0.0
        %803 = vmatpush1.msra.mxu0 0.0
        %804 = vmatprep.subr.mxu0 0.0
        %805 = vmatpush1.msra.mxu0 0.0
        %806 = vmatprep.subr.mxu0 0.0
        %807 = vmatpush1.msra.mxu0 0.0
        %808 = vmatprep.subr.mxu0 0.0
        %809 = vmatpush1.msra.mxu0 0.0
        %810 = vmatprep.subr.mxu0 0.0
        %811 = vmatpush1.msra.mxu0 0.0
        %812 = vmatprep.subr.mxu0 0.0
        %813 = vmatpush1.msra.mxu0 0.0
        %814 = vmatprep.subr.mxu0 0.0
        %815 = vmatpush1.msra.mxu0 0.0
        %816 = vmatprep.subr.mxu0 0.0
        %817 = vmatpush1.msra.mxu0 0.0
        %818 = vmatprep.mubr.f32.mxu0 0.0
        %819 = vmatmul.mubr.f32.gmra.mrb[0].mxu0 %v730
        %v820 = vpop.f32.mrb[0].mxu0
        %v821 = vadd.f32 %v752, %v820
        %v822 = vpop.f32.mrb[0].mxu0
        %823 = vdwg.mxu0
        %824 = vst [vmem:[%s442] sm:$0xff] %v821
        %s825 = sand.u32 %s238, 1
        %s826 = scalar_lea.sflag [#allocation4], %s825
        %s827 = sand.u32 %s238, 1
        %s828 = smul.addr %s827, 8
        %s829 = scalar_lea.vmem [#allocation13], %s828
        // Predicated region
        $region81: #{tpu_custom_call.1} parent=55 // pred_check
          %p830 = pneg %p248
        $region82: #{tpu_custom_call.1} parent=55 // pred_check_branch
          %832 = sbr.rel (%p830) target = $region84
        $region83: #{tpu_custom_call.1} parent=55 // pred_region
          %s834 = ssub.s32 128, 128
          %835 = vsyncadd %s826, %s834
          %s836 = smul.addr %s31, 128
          %s837 = scalar_lea.hbm %s9, %s836
          %s839 = sshll.u32 %s829, 4
          %s840 = int_to_ptr.vmem [resolvable:$true] %s839
          %842 = dma.vmem_to_hbm [thread:$0]  %s840, 128, %s837, %s826
        $region84: #{tpu_custom_call.1} parent=55 // pred_fallthru
          _
      $region56: #{tpu_custom_call.1} parent=5 // pred_fallthru
        _
      %p843 = scmp.le.s32.totalorder 2, %s26
      // Predicated region
      $region85: #{tpu_custom_call.1} parent=5 // pred_check
        %p844 = pneg %p843
      $region86: #{tpu_custom_call.1} parent=5 // pred_check_branch
        %846 = sbr.rel (%p844) target = $region88
      $region87: #{tpu_custom_call.1} parent=5 // pred_region
        %s847 = ssub.s32 %s26, 2
        // Predicated region
        $region89: #{tpu_custom_call.1} parent=87 // pred_check
          %p848 = pneg %p254
        $region90: #{tpu_custom_call.1} parent=87 // pred_check_branch
          %850 = sbr.rel (%p848) target = $region92
        $region91: #{tpu_custom_call.1} parent=87 // pred_region
          %s851 = sand.u32 %s239, 1
          %s852 = scalar_lea.sflag [#allocation4], %s851
          %s853 = sand.u32 %s239, 1
          %s854 = smul.addr %s853, 8
          %s855 = scalar_lea.vmem [#allocation13], %s854
          %856 = dma.done %s852, 128
        $region92: #{tpu_custom_call.1} parent=87 // pred_fallthru
          _
      $region88: #{tpu_custom_call.1} parent=5 // pred_fallthru
        _
    $region6: #{tpu_custom_call.1} parent=1 // loop_footer
      %s30 = sadd.s32 1, %s26
    $region7: #{tpu_custom_call.1} parent=1 // loop_footer_branch
      %25 = sbr.rel target = $region3
    $region8: #{tpu_custom_call.1} parent=1 // loop_exit
      _
    %857 = vsyncpa [#allocation3], 1
    %s858 = scalar_lea.sflag [#allocation3], 1
    %859 = vsyncpa %s858, 1
    %860 = vsyncpa [#allocation6], 1
    %s861 = scalar_lea.sflag [#allocation6], 1
    %862 = vsyncpa %s861, 1
    %863 = vsyncpa [#allocation9], 1
    %864 = vsyncpa [#allocation12], 1
    %865 = vsyncpa [#allocation4], 1
    %s866 = scalar_lea.sflag [#allocation4], 1
    %867 = vsyncpa %s866, 1

</llo_original>
